<compile_context>
chip_gen: v5e
topology: v5e:2x2
jax: 0.10.0
libtpu: 0.0.40
codegen_flags: <defaults>
</compile_context>

<pallas_src>
import jax
import jax.numpy as jnp
from jax.experimental import pallas as pl
from jax.experimental.pallas import tpu as pltpu


def _logvar_last_kernel(x_ref, o_ref):
    """Row-wise unbiased variance -> clamp -> log over the LAST (lane) axis.

    x_ref: (TM, N), o_ref: (TM, 1).
    """
    x = x_ref[...].astype(jnp.float32)
    n = x.shape[-1]
    mean = jnp.mean(x, axis=-1, keepdims=True)
    d = x - mean
    # (n - 1) == 0 -> 0/0 = NaN, same as torch.var(unbiased=True) on length-1.
    var = jnp.sum(d * d, axis=-1, keepdims=True) / jnp.float32(n - 1)
    o_ref[...] = jnp.log(jnp.clip(var, 1e-6, 1e6)).astype(o_ref.dtype)


def _logvar_mid_kernel(x_ref, o_ref):
    """Unbiased variance -> clamp -> log over the MIDDLE axis of a 3-D block.

    x_ref: (TP, R, Q), o_ref: (TP, Q).  Q stays on lanes (lane-dense).
    """
    x = x_ref[...].astype(jnp.float32)
    r = x.shape[-2]
    mean = jnp.mean(x, axis=-2, keepdims=True)
    d = x - mean
    var = jnp.sum(d * d, axis=-2) / jnp.float32(r - 1)
    o_ref[...] = jnp.log(jnp.clip(var, 1e-6, 1e6)).astype(o_ref.dtype)


def _row_tile(num_rows, row_bytes, sublane, cap_rows=1024,
              budget_bytes=4 * 1024 * 1024):
    """Rows per tile: multiple of `sublane` (or == num_rows), <= VMEM budget."""
    t = min(num_rows, cap_rows, max(sublane, budget_bytes // max(row_bytes, 1)))
    if t < num_rows:
        t = max(sublane, (t // sublane) * sublane)
    return t


def reshape_and_logvar(x, *, dim, feature, stride_factor=4):
    """JAX/Pallas equivalent of ReshapeAndLogVarLayer.forward (NCHW input)."""
    B, C, H, W = x.shape
    w_chunk = W // stride_factor
    # Module's reshape: (-1, feature, strideFactor, W // strideFactor)
    xr = x.reshape(-1, feature, stride_factor, w_chunk)
    b2 = xr.shape[0]
    shape4 = (b2, feature, stride_factor, w_chunk)
    dim = dim % 4  # allow negative dims like PyTorch

    itemsize = jnp.dtype(x.dtype).itemsize
    sublane = 16 if itemsize == 2 else 8
    compiler_params = pltpu.CompilerParams(dimension_semantics=("parallel",))

    if dim == 3:
        # Reduction axis already last: flatten kept axes to rows. No transpose.
        m = b2 * feature * stride_factor
        n = w_chunk
        x2 = xr.reshape(m, n)
        tm = _row_tile(m, n * itemsize, sublane)
        grid = (pl.cdiv(m, tm),)
        cost = pl.CostEstimate(
            flops=3 * m * n,
            transcendentals=m,
            bytes_accessed=itemsize * (m * n + m),
        )
        out2 = pl.pallas_call(
            _logvar_last_kernel,
            out_shape=jax.ShapeDtypeStruct((m, 1), x.dtype),
            grid=grid,
            in_specs=[pl.BlockSpec((tm, n), lambda i: (i, 0))],
            out_specs=pl.BlockSpec((tm, 1), lambda i: (i, 0)),
            compiler_params=compiler_params,
            cost_estimate=cost,
        )(x2)
        return out2.reshape(b2, feature, stride_factor, 1)

    # dim in {0, 1, 2}: reduce a non-last axis. Present natural-layout 3-D
    # blocks (P, R, Q) and reduce the middle axis in-kernel -> no HBM
    # transpose, lane-dense input (Q on lanes) and lane-dense (P, Q) output.
    r = shape4[dim]
    p = 1
    for s in shape4[:dim]:
        p *= s
    q = 1
    for s in shape4[dim + 1:]:
        q *= s
    x3 = xr.reshape(p, r, q)
    tp = _row_tile(p, r * q * itemsize, sublane)
    grid = (pl.cdiv(p, tp),)
    cost = pl.CostEstimate(
        flops=3 * p * r * q,
        transcendentals=p * q,
        bytes_accessed=itemsize * (p * r * q + p * q),
    )
    out2 = pl.pallas_call(
        _logvar_mid_kernel,
        out_shape=jax.ShapeDtypeStruct((p, q), x.dtype),
        grid=grid,
        in_specs=[pl.BlockSpec((tp, r, q), lambda i: (i, 0, 0))],
        out_specs=pl.BlockSpec((tp, q), lambda i: (i, 0)),
        compiler_params=compiler_params,
        cost_estimate=cost,
    )(x3)
    # keepdim=True semantics: put a singleton back at the reduced position.
    return out2.reshape(shape4[:dim] + (1,) + shape4[dim + 1:])


if __name__ == "__main__":
    key = jax.random.PRNGKey(0)

    # Small shapes consistent with the module's reshape:
    # x is (B, feature, 1, T) -> reshaped to (B, feature, strideFactor, T/strideFactor)
    B, C, H, W = 2, 8, 1, 32
    feature, stride_factor = 8, 4

    x = jax.random.normal(key, (B, C, H, W), dtype=jnp.float32)
    xr = x.reshape(-1, feature, stride_factor, W // stride_factor)

    # Exercise both kernel paths: dim=3 (reduce-last) and dim=2 (reduce-middle).
    for dim in (3, 2):
        out = reshape_and_logvar(x, dim=dim, feature=feature,
                                 stride_factor=stride_factor)
        out = jax.block_until_ready(out)
        ref = jnp.log(jnp.clip(jnp.var(xr, axis=dim, ddof=1, keepdims=True),
                               1e-6, 1e6))
        assert out.shape == ref.shape, (dim, out.shape, ref.shape)
        assert jnp.allclose(out, ref, atol=1e-5, rtol=1e-5), dim

    print("KERNEL_OK")
</pallas_src>

<mosaic_0001>
module attributes {stable_mosaic.version = 11 : i64} {
  func.func @_logvar_last_kernel(%arg0: i32, %arg1: memref<64x8xf32, #tpu.memory_space<vmem>>, %arg2: memref<64x1xf32, #tpu.memory_space<vmem>>) attributes {dimension_semantics = [#tpu.dimension_semantics<parallel>], iteration_bounds = array<i64: 1>, scalar_prefetch = 0 : i64, scratch_operands = 0 : i64, tpu.core_type = #tpu.core_type<tc>, window_params = [{transform_indices = @transform_0, window_bounds = array<i64: 64, 8>}, {transform_indices = @transform_1, window_bounds = array<i64: 64, 1>}]} {
    %c0 = arith.constant 0 : index
    %c0_0 = arith.constant 0 : index
    %0 = vector.load %arg1[%c0, %c0_0] : memref<64x8xf32, #tpu.memory_space<vmem>>, vector<64x8xf32>
    %cst = arith.constant dense<0.000000e+00> : vector<64xf32>
    %1 = vector.multi_reduction <add>, %0, %cst [1] : vector<64x8xf32> to vector<64xf32>
    %2 = vector.shape_cast %1 : vector<64xf32> to vector<64x1xf32>
    %cst_1 = arith.constant 8.000000e+00 : f32
    %3 = vector.broadcast %cst_1 : f32 to vector<64x1xf32>
    %4 = arith.divf %2, %3 : vector<64x1xf32>
    %5 = vector.broadcast %4 : vector<64x1xf32> to vector<64x8xf32>
    %6 = arith.subf %0, %5 : vector<64x8xf32>
    %7 = arith.mulf %6, %6 : vector<64x8xf32>
    %cst_2 = arith.constant dense<0.000000e+00> : vector<64xf32>
    %8 = vector.multi_reduction <add>, %7, %cst_2 [1] : vector<64x8xf32> to vector<64xf32>
    %9 = vector.shape_cast %8 : vector<64xf32> to vector<64x1xf32>
    %cst_3 = arith.constant 7.000000e+00 : f32
    %10 = vector.broadcast %cst_3 : f32 to vector<64x1xf32>
    %11 = arith.divf %9, %10 : vector<64x1xf32>
    %cst_4 = arith.constant 9.99999997E-7 : f32
    %cst_5 = arith.constant 1.000000e+06 : f32
    %12 = vector.broadcast %cst_4 : f32 to vector<64x1xf32>
    %13 = arith.maximumf %12, %11 : vector<64x1xf32>
    %14 = vector.broadcast %cst_5 : f32 to vector<64x1xf32>
    %15 = arith.minimumf %14, %13 : vector<64x1xf32>
    %16 = math.log %15 : vector<64x1xf32>
    %c0_6 = arith.constant 0 : index
    %c0_7 = arith.constant 0 : index
    %17 = vector.load %arg2[%c0_6, %c0_7] : memref<64x1xf32, #tpu.memory_space<vmem>>, vector<64x1xf32>
    tpu.vector_store %arg2[%c0_6, %c0_7], %16 {strides = array<i32>} : memref<64x1xf32, #tpu.memory_space<vmem>>, vector<64x1xf32>,
    return
  }
  func.func @transform_0(%arg0: i32) -> (i32, i32) {
    %c0_i32 = arith.constant 0 : i32
    %c0_i32_0 = arith.constant 0 : i32
    return %arg0, %c0_i32 : i32, i32
  }
  func.func @transform_1(%arg0: i32) -> (i32, i32) {
    %c0_i32 = arith.constant 0 : i32
    %c0_i32_0 = arith.constant 0 : i32
    return %arg0, %c0_i32 : i32, i32
  }
}

</mosaic_0001>

<llo_original>
// kernel: tpu_custom_call.1
$region0: #{tpu_custom_call.1}
  #allocation0 [shape = 'u32[]', space=smem, size = 0x4, offset = 0x4, fixed_abs, tag = 'smem constant byte address 0x4 - core index']
  #allocation1 [shape = 'u32[72,128]{1,0:T(1,128)}', space=vmem, size = 0x9000, scoped, tag = 'internal scratch']
  %s0 = inlined_call_operand.vmem [shape: f32[64,8], index: 0, kind: input, shape index: {}]
  %s1 = inlined_call_operand.vmem [shape: f32[64,1], index: 1, kind: output, shape index: {}]
  %s2 = sld [smem:[#allocation0]]
  $region14: #{tpu_custom_call.1} parent=0
    _
  %s4 = ssub.s32 1, %s2
  %s5 = scalar_select 0, %s4, %s2
  // Predicated region
  $region2: #{tpu_custom_call.1} parent=0 // pred_check
    _
  $region3: #{tpu_custom_call.1} parent=0 // pred_check_branch
    %7 = sbr.rel (0) target = $region5
  $region4: #{tpu_custom_call.1} parent=0 // pred_region
    _
  $region5: #{tpu_custom_call.1} parent=0 // pred_fallthru
    _
  %v8 = vld [vmem:[%s0] sm:$0xff]
  %v9 = vld [vmem:[%s0 + $0x8] sm:$0xff]
  %v10 = vld [vmem:[%s0 + $0x10] sm:$0xff]
  %v11 = vld [vmem:[%s0 + $0x18] sm:$0xff]
  %v12 = vld [vmem:[%s0 + $0x20] sm:$0xff]
  %v13 = vld [vmem:[%s0 + $0x28] sm:$0xff]
  %v14 = vld [vmem:[%s0 + $0x30] sm:$0xff]
  %v15 = vld [vmem:[%s0 + $0x38] sm:$0xff]
  %vm16 = vcmask 64512
  %v17 = vsel %vm16, %v8, 0.0
  %18 = vadd.xlane.f32.xlu0 %v17
  %v19 = vpop.xlane.xlu0 %18
  %v20 = vsel %vm16, %v9, 0.0
  %21 = vadd.xlane.f32.xlu0 %v20
  %v22 = vpop.xlane.xlu0 %21
  %v23 = vsel %vm16, %v10, 0.0
  %24 = vadd.xlane.f32.xlu0 %v23
  %v25 = vpop.xlane.xlu0 %24
  %v26 = vsel %vm16, %v11, 0.0
  %27 = vadd.xlane.f32.xlu0 %v26
  %v28 = vpop.xlane.xlu0 %27
  %v29 = vsel %vm16, %v12, 0.0
  %30 = vadd.xlane.f32.xlu0 %v29
  %v31 = vpop.xlane.xlu0 %30
  %v32 = vsel %vm16, %v13, 0.0
  %33 = vadd.xlane.f32.xlu0 %v32
  %v34 = vpop.xlane.xlu0 %33
  %v35 = vsel %vm16, %v14, 0.0
  %36 = vadd.xlane.f32.xlu0 %v35
  %v37 = vpop.xlane.xlu0 %36
  %v38 = vsel %vm16, %v15, 0.0
  %39 = vadd.xlane.f32.xlu0 %v38
  %v40 = vpop.xlane.xlu0 %39
  %v41 = vrcp.pop 8.0
  %v42 = vmul.f32 8.0, %v41
  %v43 = vsub.f32 1.0, %v42
  %v44 = vmul.f32 %v41, %v43
  %v45 = vadd.f32 %v41, %v44
  %vm46 = vweird.f32 %v41
  %v47 = vsel %vm46, %v41, %v45
  %v48 = vmul.f32 %v19, %v47
  %v49 = vmul.f32 %v22, %v47
  %v50 = vmul.f32 %v25, %v47
  %v51 = vmul.f32 %v28, %v47
  %v52 = vmul.f32 %v31, %v47
  %v53 = vmul.f32 %v34, %v47
  %v54 = vmul.f32 %v37, %v47
  %v55 = vmul.f32 %v40, %v47
  %v56 = vsub.f32 %v8, %v48
  %v57 = vsub.f32 %v9, %v49
  %v58 = vsub.f32 %v10, %v50
  %v59 = vsub.f32 %v11, %v51
  %v60 = vsub.f32 %v12, %v52
  %v61 = vsub.f32 %v13, %v53
  %v62 = vsub.f32 %v14, %v54
  %v63 = vsub.f32 %v15, %v55
  %v64 = vmul.f32 %v56, %v56
  %v65 = vmul.f32 %v57, %v57
  %v66 = vmul.f32 %v58, %v58
  %v67 = vmul.f32 %v59, %v59
  %v68 = vmul.f32 %v60, %v60
  %v69 = vmul.f32 %v61, %v61
  %v70 = vmul.f32 %v62, %v62
  %v71 = vmul.f32 %v63, %v63
  %v72 = vsel %vm16, %v64, 0.0
  %73 = vadd.xlane.f32.xlu0 %v72
  %v74 = vpop.xlane.xlu0 %73
  %v75 = vsel %vm16, %v65, 0.0
  %76 = vadd.xlane.f32.xlu0 %v75
  %v77 = vpop.xlane.xlu0 %76
  %v78 = vsel %vm16, %v66, 0.0
  %79 = vadd.xlane.f32.xlu0 %v78
  %v80 = vpop.xlane.xlu0 %79
  %v81 = vsel %vm16, %v67, 0.0
  %82 = vadd.xlane.f32.xlu0 %v81
  %v83 = vpop.xlane.xlu0 %82
  %v84 = vsel %vm16, %v68, 0.0
  %85 = vadd.xlane.f32.xlu0 %v84
  %v86 = vpop.xlane.xlu0 %85
  %v87 = vsel %vm16, %v69, 0.0
  %88 = vadd.xlane.f32.xlu0 %v87
  %v89 = vpop.xlane.xlu0 %88
  %v90 = vsel %vm16, %v70, 0.0
  %91 = vadd.xlane.f32.xlu0 %v90
  %v92 = vpop.xlane.xlu0 %91
  %v93 = vsel %vm16, %v71, 0.0
  %94 = vadd.xlane.f32.xlu0 %v93
  %v95 = vpop.xlane.xlu0 %94
  %v96 = vrcp.pop 7.0
  %v97 = vmul.f32 7.0, %v96
  %v98 = vsub.f32 1.0, %v97
  %v99 = vmul.f32 %v96, %v98
  %v100 = vadd.f32 %v96, %v99
  %vm101 = vweird.f32 %v96
  %v102 = vsel %vm101, %v96, %v100
  %v103 = vmul.f32 %v74, %v102
  %v104 = vmul.f32 %v77, %v102
  %v105 = vmul.f32 %v80, %v102
  %v106 = vmul.f32 %v83, %v102
  %v107 = vmul.f32 %v86, %v102
  %v108 = vmul.f32 %v89, %v102
  %v109 = vmul.f32 %v92, %v102
  %v110 = vmul.f32 %v95, %v102
  %v111 = vmax.f32 %v103, 1e-06
  %v112 = vmax.f32 %v104, 1e-06
  %v113 = vmax.f32 %v105, 1e-06
  %v114 = vmax.f32 %v106, 1e-06
  %v115 = vmax.f32 %v107, 1e-06
  %v116 = vmax.f32 %v108, 1e-06
  %v117 = vmax.f32 %v109, 1e-06
  %v118 = vmax.f32 %v110, 1e-06
  %v119 = vmin.f32 %v111, 1000000.0
  %v120 = vmin.f32 %v112, 1000000.0
  %v121 = vmin.f32 %v113, 1000000.0
  %v122 = vmin.f32 %v114, 1000000.0
  %v123 = vmin.f32 %v115, 1000000.0
  %v124 = vmin.f32 %v116, 1000000.0
  %v125 = vmin.f32 %v117, 1000000.0
  %v126 = vmin.f32 %v118, 1000000.0
  %v127 = vlog2.pop %v119
  %v128 = vmul.f32 %v127, 0.6931472
  %v129 = vlog2.pop %v120
  %v130 = vmul.f32 %v129, 0.6931472
  %v131 = vlog2.pop %v121
  %v132 = vmul.f32 %v131, 0.6931472
  %v133 = vlog2.pop %v122
  %v134 = vmul.f32 %v133, 0.6931472
  %v135 = vlog2.pop %v123
  %v136 = vmul.f32 %v135, 0.6931472
  %v137 = vlog2.pop %v124
  %v138 = vmul.f32 %v137, 0.6931472
  %v139 = vlog2.pop %v125
  %v140 = vmul.f32 %v139, 0.6931472
  %v141 = vlog2.pop %v126
  %v142 = vmul.f32 %v141, 0.6931472
  %vm143 = vcmask 7168
  %144 = vst.msk [vmem:[%s1] sm:$0xff] %vm143, %v128
  %145 = vst.msk [vmem:[%s1 + $0x8] sm:$0xff] %vm143, %v130
  %146 = vst.msk [vmem:[%s1 + $0x10] sm:$0xff] %vm143, %v132
  %147 = vst.msk [vmem:[%s1 + $0x18] sm:$0xff] %vm143, %v134
  %148 = vst.msk [vmem:[%s1 + $0x20] sm:$0xff] %vm143, %v136
  %149 = vst.msk [vmem:[%s1 + $0x28] sm:$0xff] %vm143, %v138
  %150 = vst.msk [vmem:[%s1 + $0x30] sm:$0xff] %vm143, %v140
  %151 = vst.msk [vmem:[%s1 + $0x38] sm:$0xff] %vm143, %v142
  // Predicated region
  $region6: #{tpu_custom_call.1} parent=0 // pred_check
    _
  $region7: #{tpu_custom_call.1} parent=0 // pred_check_branch
    %153 = sbr.rel (0) target = $region9
  $region8: #{tpu_custom_call.1} parent=0 // pred_region
    _
  $region9: #{tpu_custom_call.1} parent=0 // pred_fallthru
    _
  // Predicated region
  $region10: #{tpu_custom_call.1} parent=0 // pred_check
    _
  $region11: #{tpu_custom_call.1} parent=0 // pred_check_branch
    %155 = sbr.rel (0) target = $region13
  $region12: #{tpu_custom_call.1} parent=0 // pred_region
    _
  $region13: #{tpu_custom_call.1} parent=0 // pred_fallthru
    _

</llo_original>
